<compile_context>
chip_gen: v5e
topology: v5e:2x2
jax: 0.10.0
libtpu: 0.0.40
codegen_flags: <defaults>
</compile_context>

<pallas_src>
import functools

import numpy as np
import jax
import jax.numpy as jnp
from jax import lax
from jax.experimental import pallas as pl
from jax.experimental.pallas import tpu as pltpu


def _round_up(x, m):
    return (x + m - 1) // m * m


# ------------------------------ im2col (XLA) --------------------------------

def im2col(x, K, S, pad):
    """x: (N, C, H, W) -> patches (N*Ho*Wo, C*K*K), columns ordered (c, ki, kj)."""
    N, C, H, W = x.shape
    xp = jnp.pad(x, ((0, 0), (0, 0), (pad, pad), (pad, pad)))
    Ho = (H + 2 * pad - K) // S + 1
    Wo = (W + 2 * pad - K) // S + 1
    slices = []
    for ki in range(K):
        for kj in range(K):
            slices.append(xp[:, :, ki:ki + S * Ho:S, kj:kj + S * Wo:S])  # (N,C,Ho,Wo)
    p = jnp.stack(slices, axis=2)                 # (N, C, K*K, Ho, Wo)
    p = p.transpose(0, 3, 4, 1, 2)                # (N, Ho, Wo, C, K*K)
    return p.reshape(N * Ho * Wo, C * K * K), Ho, Wo


# --------------------------- Pallas kernel bodies ----------------------------

def _conv_stats_kernel(a_ref, w_ref, conv_ref, stats_ref):
    """One M-tile of the im2col matmul plus per-column partial BN statistics.

    a_ref:     (TM, Kp)  bf16 patches tile
    w_ref:     (Kp, Cp)  bf16 folded conv weight (resident across the grid)
    conv_ref:  (TM, Cp)  f32 conv output tile
    stats_ref: (8,  Cp)  f32 partial stats (row 0 = sum, row 1 = sum of squares)
    """
    acc = jnp.dot(a_ref[...], w_ref[...], preferred_element_type=jnp.float32)
    conv_ref[...] = acc
    s = jnp.sum(acc, axis=0, keepdims=True)
    sq = jnp.sum(acc * acc, axis=0, keepdims=True)
    pad = jnp.zeros((6, acc.shape[1]), jnp.float32)
    stats_ref[...] = jnp.concatenate([s, sq, pad], axis=0)


def _bn_apply_kernel(conv_ref, par_ref, out_ref, *, bpp, nb):
    """Fused per-column affine BN + sigmoid on the activation columns only."""
    x = conv_ref[...]                       # (TM, Cp) f32
    scale = par_ref[0:1, :]                 # (1, Cp), broadcast over rows
    shift = par_ref[1:2, :]
    y = x * scale + shift
    col = lax.broadcasted_iota(jnp.int32, x.shape, 1)
    is_act = (col >= bpp) & (col < bpp + nb)
    out_ref[...] = jnp.where(is_act, jax.nn.sigmoid(y), y)


# --------------------------- pallas_call wrappers ----------------------------

def conv_and_stats(patches, w2d, tile_m):
    """patches: (Mp, Kp) bf16, w2d: (Kp, Cp) bf16 -> (conv (Mp, Cp) f32,
    per-tile stats (num_tiles*8, Cp) f32)."""
    Mp, Kp = patches.shape
    _, Cp = w2d.shape
    nt = Mp // tile_m
    return pl.pallas_call(
        _conv_stats_kernel,
        out_shape=(jax.ShapeDtypeStruct((Mp, Cp), jnp.float32),
                   jax.ShapeDtypeStruct((nt * 8, Cp), jnp.float32)),
        grid=(nt,),
        in_specs=[
            pl.BlockSpec((tile_m, Kp), lambda i: (i, 0)),
            pl.BlockSpec((Kp, Cp), lambda i: (0, 0)),
        ],
        out_specs=(
            pl.BlockSpec((tile_m, Cp), lambda i: (i, 0)),
            pl.BlockSpec((8, Cp), lambda i: (i, 0)),
        ),
        compiler_params=pltpu.CompilerParams(dimension_semantics=("parallel",)),
    )(patches, w2d)


def bn_apply(conv, params, tile_m, bpp, nb):
    """conv: (Mp, Cp) f32, params: (8, Cp) f32 (row0=scale, row1=shift)."""
    Mp, Cp = conv.shape
    nt = Mp // tile_m
    kernel = functools.partial(_bn_apply_kernel, bpp=bpp, nb=nb)
    return pl.pallas_call(
        kernel,
        out_shape=jax.ShapeDtypeStruct((Mp, Cp), jnp.float32),
        grid=(nt,),
        in_specs=[
            pl.BlockSpec((tile_m, Cp), lambda i: (i, 0)),
            pl.BlockSpec((8, Cp), lambda i: (0, 0)),
        ],
        out_specs=pl.BlockSpec((tile_m, Cp), lambda i: (i, 0)),
        compiler_params=pltpu.CompilerParams(dimension_semantics=("parallel",)),
    )(conv, params)


# --------------------------------- module ------------------------------------

class PrimaryCapsules2dPallas:
    """Pallas port of VarCaps PrimaryCapsules2d (xavier_uniform init)."""

    def __init__(self, in_channels, out_caps, kernel_size, stride, padding=0,
                 pose_dim=4, key=None, max_tile_m=1024):
        self.A, self.B, self.P = in_channels, out_caps, pose_dim
        self.K, self.S, self.padding = kernel_size, stride, padding
        self.Cout = self.B * self.P * self.P + self.B
        self.eps = 1e-5
        self.max_tile_m = max_tile_m
        if key is None:
            key = jax.random.PRNGKey(0)
        kw, ka = jax.random.split(key)

        def xavier_uniform(k, shape):
            cout, cin, kh, kw_ = shape
            fan_in = cin * kh * kw_
            fan_out = cout * kh * kw_
            bound = (6.0 / (fan_in + fan_out)) ** 0.5
            return jax.random.uniform(k, shape, jnp.float32, -bound, bound)

        w_kernel = xavier_uniform(kw, (self.B * self.P * self.P, self.A, self.K, self.K))
        a_kernel = xavier_uniform(ka, (self.B, self.A, self.K, self.K))
        # (B*P*P + B, A, K, K), same layout as the torch nn.Parameter
        self.weight = jnp.concatenate([w_kernel, a_kernel], axis=0)
        # BatchNorm affine params (torch defaults: gamma=1, beta=0)
        self.bn_p_gamma = jnp.ones((self.B,), jnp.float32)
        self.bn_p_beta = jnp.zeros((self.B,), jnp.float32)
        self.bn_a_gamma = jnp.ones((self.B,), jnp.float32)
        self.bn_a_beta = jnp.zeros((self.B,), jnp.float32)
        # TODO(synk): eval-mode BN with running stats is not modelled (train-mode
        # batch statistics only, matching the module's default training mode).
        self._forward = jax.jit(self._forward_impl)

    def __call__(self, x):
        return self._forward(x)

    def _forward_impl(self, x):
        N, A, H, W = x.shape
        assert A == self.A
        B, P, K, S, pad = self.B, self.P, self.K, self.S, self.padding
        PP = P * P
        BPP = B * PP
        Cout = self.Cout

        # --- im2col -> lane-dense, zero-padded bf16 matmul operands ---
        # TODO(synk): patch extraction is still materialized by XLA; the strided
        # window gather cannot be expressed with a BlockSpec index_map alone.
        patches, Ho, Wo = im2col(x, K, S, pad)          # (M, Kd) f32
        M, Kd = patches.shape
        Kp = _round_up(Kd, 128)
        Cp = _round_up(Cout, 128)
        tile_m = min(self.max_tile_m, _round_up(M, 8))
        Mp = _round_up(M, tile_m)
        nt = Mp // tile_m

        patches_p = jnp.pad(patches.astype(jnp.bfloat16),
                            ((0, Mp - M), (0, Kp - Kd)))
        w2d = self.weight.reshape(Cout, Kd).T            # (Kd, Cout)
        w2d_p = jnp.pad(w2d.astype(jnp.bfloat16),
                        ((0, Kp - Kd), (0, Cp - Cout)))

        # --- Pallas: tiled bf16 MXU matmul + fused partial BN statistics ---
        conv, stats = conv_and_stats(patches_p, w2d_p, tile_m)
        stats = stats.reshape(nt, 8, Cp)
        colsum = jnp.sum(stats[:, 0, :], axis=0)         # (Cp,)
        colsq = jnp.sum(stats[:, 1, :], axis=0)

        # --- tiny O(Cout) stat folding (padded rows/cols contribute exactly 0) ---
        cnt_p = float(M * PP)
        pose_mean = colsum[:BPP].reshape(B, PP).sum(axis=1) / cnt_p
        pose_ms = colsq[:BPP].reshape(B, PP).sum(axis=1) / cnt_p
        pose_var = jnp.maximum(pose_ms - pose_mean * pose_mean, 0.0)
        act_mean = colsum[BPP:Cout] / float(M)
        act_ms = colsq[BPP:Cout] / float(M)
        act_var = jnp.maximum(act_ms - act_mean * act_mean, 0.0)

        scale_p = self.bn_p_gamma * lax.rsqrt(pose_var + self.eps)
        shift_p = self.bn_p_beta - pose_mean * scale_p
        scale_a = self.bn_a_gamma * lax.rsqrt(act_var + self.eps)
        shift_a = self.bn_a_beta - act_mean * scale_a

        zpad = jnp.zeros((Cp - Cout,), jnp.float32)
        scale_cols = jnp.concatenate([jnp.repeat(scale_p, PP), scale_a, zpad])
        shift_cols = jnp.concatenate([jnp.repeat(shift_p, PP), shift_a, zpad])
        params = jnp.pad(jnp.stack([scale_cols, shift_cols], axis=0),
                         ((0, 6), (0, 0)))               # (8, Cp)

        # --- Pallas: fused BN affine + sigmoid, lane-dense output ---
        normed = bn_apply(conv, params, tile_m, BPP, B)  # (Mp, Cp) f32

        poses = normed[:M, :BPP].reshape(N, Ho, Wo, B, P, P)
        poses = poses.transpose(0, 3, 4, 5, 1, 2)        # (N, B, P, P, Ho, Wo)
        acts = normed[:M, BPP:Cout].reshape(N, Ho, Wo, B)
        acts = acts.transpose(0, 3, 1, 2)                # (N, B, Ho, Wo)
        return acts, poses


# --------------------------- pure-JAX reference ------------------------------

def reference_forward(x, weight, B, P, K, S, pad, eps=1e-5):
    out = lax.conv_general_dilated(
        x, weight, window_strides=(S, S), padding=[(pad, pad), (pad, pad)],
        dimension_numbers=("NCHW", "OIHW", "NCHW"),
        precision=lax.Precision.HIGHEST)
    N, _, Ho, Wo = out.shape
    BPP = B * P * P
    poses = out[:, :BPP].reshape(N, B, P * P, Ho, Wo)
    mean = poses.mean(axis=(0, 2, 3, 4), keepdims=True)
    var = ((poses - mean) ** 2).mean(axis=(0, 2, 3, 4), keepdims=True)
    poses = ((poses - mean) / jnp.sqrt(var + eps)).reshape(N, B, P, P, Ho, Wo)
    acts = out[:, BPP:]
    mean_a = acts.mean(axis=(0, 2, 3), keepdims=True)
    var_a = ((acts - mean_a) ** 2).mean(axis=(0, 2, 3), keepdims=True)
    acts = jax.nn.sigmoid((acts - mean_a) / jnp.sqrt(var_a + eps))
    return acts, poses


# --------------------------------- main ---------------------------------------

if __name__ == "__main__":
    key = jax.random.PRNGKey(0)
    k_x, k_w = jax.random.split(key)

    # Small shapes consistent with the module: A=4 in-channels, B=8 capsules,
    # pose 4x4, 3x3 conv, stride 2, padding 1 on a 16x16 input.
    N, A, H, W = 2, 4, 16, 16
    B, P, K, S, pad = 8, 4, 3, 2, 1

    x = jax.random.normal(k_x, (N, A, H, W), jnp.float32)
    mod = PrimaryCapsules2dPallas(A, B, K, S, padding=pad, pose_dim=P, key=k_w)

    activations, poses = mod(x)
    activations = jax.block_until_ready(activations)
    poses = jax.block_until_ready(poses)

    Ho = (H + 2 * pad - K) // S + 1
    Wo = (W + 2 * pad - K) // S + 1
    assert activations.shape == (N, B, Ho, Wo), activations.shape
    assert poses.shape == (N, B, P, P, Ho, Wo), poses.shape

    a_ref, p_ref = reference_forward(x, mod.weight, B, P, K, S, pad)
    # bf16-in / f32-acc MXU matmul vs f32 HIGHEST reference -> relaxed tolerance.
    np.testing.assert_allclose(np.asarray(activations), np.asarray(a_ref),
                               atol=2e-2, rtol=2e-2)
    np.testing.assert_allclose(np.asarray(poses), np.asarray(p_ref),
                               atol=2e-2, rtol=2e-2)

    print("KERNEL_OK")
</pallas_src>

<mosaic_0001>
module attributes {stable_mosaic.version = 11 : i64} {
  func.func @_conv_stats_kernel(%arg0: i32, %arg1: memref<128x128xbf16, #tpu.memory_space<vmem>>, %arg2: memref<128x256xbf16, #tpu.memory_space<vmem>>, %arg3: memref<128x256xf32, #tpu.memory_space<vmem>>, %arg4: memref<8x256xf32, #tpu.memory_space<vmem>>) attributes {dimension_semantics = [#tpu.dimension_semantics<parallel>], iteration_bounds = array<i64: 1>, scalar_prefetch = 0 : i64, scratch_operands = 0 : i64, tpu.core_type = #tpu.core_type<tc>, window_params = [{transform_indices = @transform_0, window_bounds = array<i64: 128, 128>}, {pipeline_mode = #tpu.pipeline_mode<synchronous>, transform_indices = @transform_1, window_bounds = array<i64: 128, 256>}, {transform_indices = @transform_2, window_bounds = array<i64: 128, 256>}, {transform_indices = @transform_3, window_bounds = array<i64: 8, 256>}]} {
    %c0 = arith.constant 0 : index
    %c0_0 = arith.constant 0 : index
    %0 = vector.load %arg1[%c0, %c0_0] : memref<128x128xbf16, #tpu.memory_space<vmem>>, vector<128x128xbf16>
    %c0_1 = arith.constant 0 : index
    %c0_2 = arith.constant 0 : index
    %1 = vector.load %arg2[%c0_1, %c0_2] : memref<128x256xbf16, #tpu.memory_space<vmem>>, vector<128x256xbf16>
    %cst = arith.constant dense<0.000000e+00> : vector<128x256xf32>
    %2 = tpu.matmul %0, %1, %cst {dimension_numbers = #tpu.dot_dimension_numbers<[1], [0], [0], [1], [0, 0, 1, 1], [], []>} : vector<128x128xbf16>, vector<128x256xbf16>, vector<128x256xf32> -> vector<128x256xf32>
    %c0_3 = arith.constant 0 : index
    %c0_4 = arith.constant 0 : index
    %3 = vector.load %arg3[%c0_3, %c0_4] : memref<128x256xf32, #tpu.memory_space<vmem>>, vector<128x256xf32>
    tpu.vector_store %arg3[%c0_3, %c0_4], %2 {strides = array<i32>} : memref<128x256xf32, #tpu.memory_space<vmem>>, vector<128x256xf32>,
    %cst_5 = arith.constant dense<0.000000e+00> : vector<256xf32>
    %4 = vector.multi_reduction <add>, %2, %cst_5 [0] : vector<128x256xf32> to vector<256xf32>
    %5 = vector.shape_cast %4 : vector<256xf32> to vector<1x256xf32>
    %6 = arith.mulf %2, %2 : vector<128x256xf32>
    %cst_6 = arith.constant dense<0.000000e+00> : vector<256xf32>
    %7 = vector.multi_reduction <add>, %6, %cst_6 [0] : vector<128x256xf32> to vector<256xf32>
    %8 = vector.shape_cast %7 : vector<256xf32> to vector<1x256xf32>
    %cst_7 = arith.constant 0.000000e+00 : f32
    %9 = vector.broadcast %cst_7 : f32 to vector<6x256xf32>
    %10 = tpu.concatenate %5, %8, %9 in 0 : vector<1x256xf32>, vector<1x256xf32>, vector<6x256xf32> -> vector<8x256xf32>
    %c0_8 = arith.constant 0 : index
    %c0_9 = arith.constant 0 : index
    %11 = vector.load %arg4[%c0_8, %c0_9] : memref<8x256xf32, #tpu.memory_space<vmem>>, vector<8x256xf32>
    tpu.vector_store %arg4[%c0_8, %c0_9], %10 {strides = array<i32>} : memref<8x256xf32, #tpu.memory_space<vmem>>, vector<8x256xf32>,
    return
  }
  func.func @transform_0(%arg0: i32) -> (i32, i32) {
    %c0_i32 = arith.constant 0 : i32
    %c0_i32_0 = arith.constant 0 : i32
    return %arg0, %c0_i32 : i32, i32
  }
  func.func @transform_1(%arg0: i32) -> (i32, i32) {
    %c0_i32 = arith.constant 0 : i32
    %c0_i32_0 = arith.constant 0 : i32
    %c0_i32_1 = arith.constant 0 : i32
    return %c0_i32, %c0_i32_0 : i32, i32
  }
  func.func @transform_2(%arg0: i32) -> (i32, i32) {
    %c0_i32 = arith.constant 0 : i32
    %c0_i32_0 = arith.constant 0 : i32
    return %arg0, %c0_i32 : i32, i32
  }
  func.func @transform_3(%arg0: i32) -> (i32, i32) {
    %c0_i32 = arith.constant 0 : i32
    %c0_i32_0 = arith.constant 0 : i32
    return %arg0, %c0_i32 : i32, i32
  }
}

module attributes {stable_mosaic.version = 11 : i64} {
  func.func @_bn_apply_kernel(%arg0: i32, %arg1: memref<128x256xf32, #tpu.memory_space<vmem>>, %arg2: memref<8x256xf32, #tpu.memory_space<vmem>>, %arg3: memref<128x256xf32, #tpu.memory_space<vmem>>) attributes {dimension_semantics = [#tpu.dimension_semantics<parallel>], iteration_bounds = array<i64: 1>, scalar_prefetch = 0 : i64, scratch_operands = 0 : i64, tpu.core_type = #tpu.core_type<tc>, window_params = [{transform_indices = @transform_0, window_bounds = array<i64: 128, 256>}, {pipeline_mode = #tpu.pipeline_mode<synchronous>, transform_indices = @transform_1, window_bounds = array<i64: 8, 256>}, {transform_indices = @transform_2, window_bounds = array<i64: 128, 256>}]} {
    %c0 = arith.constant 0 : index
    %c0_0 = arith.constant 0 : index
    %0 = vector.load %arg1[%c0, %c0_0] : memref<128x256xf32, #tpu.memory_space<vmem>>, vector<128x256xf32>
    %c0_1 = arith.constant 0 : index
    %c0_2 = arith.constant 0 : index
    %1 = vector.load %arg2[%c0_1, %c0_2] : memref<8x256xf32, #tpu.memory_space<vmem>>, vector<1x256xf32>
    %c1 = arith.constant 1 : index
    %c0_3 = arith.constant 0 : index
    %2 = vector.load %arg2[%c1, %c0_3] : memref<8x256xf32, #tpu.memory_space<vmem>>, vector<1x256xf32>
    %3 = vector.broadcast %1 : vector<1x256xf32> to vector<128x256xf32>
    %4 = arith.mulf %0, %3 : vector<128x256xf32>
    %5 = vector.broadcast %2 : vector<1x256xf32> to vector<128x256xf32>
    %6 = arith.addf %4, %5 : vector<128x256xf32>
    %7 = tpu.iota {dimensions = array<i32: 1>} : vector<128x256xi32>
    %c128_i32 = arith.constant 128 : i32
    %8 = vector.broadcast %c128_i32 : i32 to vector<128x256xi32>
    %9 = arith.cmpi sge, %7, %8 : vector<128x256xi32>
    %c136_i32 = arith.constant 136 : i32
    %10 = vector.broadcast %c136_i32 : i32 to vector<128x256xi32>
    %11 = arith.cmpi slt, %7, %10 : vector<128x256xi32>
    %12 = arith.andi %9, %11 : vector<128x256xi1>
    %13 = arith.negf %6 : vector<128x256xf32>
    %14 = math.exp %13 : vector<128x256xf32>
    %cst = arith.constant 1.000000e+00 : f32
    %15 = vector.broadcast %cst : f32 to vector<128x256xf32>
    %16 = arith.addf %15, %14 : vector<128x256xf32>
    %17 = arith.divf %15, %16 : vector<128x256xf32>
    %18 = arith.select %12, %17, %6 : vector<128x256xi1>, vector<128x256xf32>
    %c0_4 = arith.constant 0 : index
    %c0_5 = arith.constant 0 : index
    %19 = vector.load %arg3[%c0_4, %c0_5] : memref<128x256xf32, #tpu.memory_space<vmem>>, vector<128x256xf32>
    tpu.vector_store %arg3[%c0_4, %c0_5], %18 {strides = array<i32>} : memref<128x256xf32, #tpu.memory_space<vmem>>, vector<128x256xf32>,
    return
  }
  func.func @transform_0(%arg0: i32) -> (i32, i32) {
    %c0_i32 = arith.constant 0 : i32
    %c0_i32_0 = arith.constant 0 : i32
    return %arg0, %c0_i32 : i32, i32
  }
  func.func @transform_1(%arg0: i32) -> (i32, i32) {
    %c0_i32 = arith.constant 0 : i32
    %c0_i32_0 = arith.constant 0 : i32
    %c0_i32_1 = arith.constant 0 : i32
    return %c0_i32, %c0_i32_0 : i32, i32
  }
  func.func @transform_2(%arg0: i32) -> (i32, i32) {
    %c0_i32 = arith.constant 0 : i32
    %c0_i32_0 = arith.constant 0 : i32
    return %arg0, %c0_i32 : i32, i32
  }
}

</mosaic_0001>

<llo_original>
// kernel: _forward_impl.3
$region0: #{_forward_impl.3}
  #allocation0 [shape = 'u32[]', space=smem, size = 0x4, offset = 0x4, fixed_abs, tag = 'smem constant byte address 0x4 - core index']
  #allocation1 [shape = 'u32[72,128]{1,0:T(1,128)}', space=vmem, size = 0x9000, scoped, tag = 'internal scratch']
  %s0 = inlined_call_operand.vmem [shape: f32[128,256], index: 0, kind: input, shape index: {}]
  %s1 = inlined_call_operand.vmem [shape: f32[8,256], index: 1, kind: input, shape index: {}]
  %s2 = inlined_call_operand.vmem [shape: f32[128,256], index: 2, kind: output, shape index: {}]
  %s3 = sld [smem:[#allocation0]]
  $region18: #{_forward_impl.3} parent=0
    _
  %s5 = ssub.s32 1, %s3
  %s6 = scalar_select 0, %s5, %s3
  // Predicated region
  $region2: #{_forward_impl.3} parent=0 // pred_check
    _
  $region3: #{_forward_impl.3} parent=0 // pred_check_branch
    %8 = sbr.rel (0) target = $region5
  $region4: #{_forward_impl.3} parent=0 // pred_region
    _
  $region5: #{_forward_impl.3} parent=0 // pred_fallthru
    _
  // Predicated region
  $region6: #{_forward_impl.3} parent=0 // pred_check
    _
  $region7: #{_forward_impl.3} parent=0 // pred_check_branch
    %10 = sbr.rel (0) target = $region9
  $region8: #{_forward_impl.3} parent=0 // pred_region
    _
  $region9: #{_forward_impl.3} parent=0 // pred_fallthru
    _
  %v11 = vld [vmem:[%s0] sm:$0xff]
  %v12 = vld [vmem:[%s0 + $0x8] sm:$0xff]
  %v13 = vld [vmem:[%s0 + $0x10] sm:$0xff]
  %v14 = vld [vmem:[%s0 + $0x18] sm:$0xff]
  %v15 = vld [vmem:[%s0 + $0x20] sm:$0xff]
  %v16 = vld [vmem:[%s0 + $0x28] sm:$0xff]
  %v17 = vld [vmem:[%s0 + $0x30] sm:$0xff]
  %v18 = vld [vmem:[%s0 + $0x38] sm:$0xff]
  %v19 = vld [vmem:[%s0 + $0x40] sm:$0xff]
  %v20 = vld [vmem:[%s0 + $0x48] sm:$0xff]
  %v21 = vld [vmem:[%s0 + $0x50] sm:$0xff]
  %v22 = vld [vmem:[%s0 + $0x58] sm:$0xff]
  %v23 = vld [vmem:[%s0 + $0x60] sm:$0xff]
  %v24 = vld [vmem:[%s0 + $0x68] sm:$0xff]
  %v25 = vld [vmem:[%s0 + $0x70] sm:$0xff]
  %v26 = vld [vmem:[%s0 + $0x78] sm:$0xff]
  %v27 = vld [vmem:[%s0 + $0x80] sm:$0xff]
  %v28 = vld [vmem:[%s0 + $0x88] sm:$0xff]
  %v29 = vld [vmem:[%s0 + $0x90] sm:$0xff]
  %v30 = vld [vmem:[%s0 + $0x98] sm:$0xff]
  %v31 = vld [vmem:[%s0 + $0xa0] sm:$0xff]
  %v32 = vld [vmem:[%s0 + $0xa8] sm:$0xff]
  %v33 = vld [vmem:[%s0 + $0xb0] sm:$0xff]
  %v34 = vld [vmem:[%s0 + $0xb8] sm:$0xff]
  %v35 = vld [vmem:[%s0 + $0xc0] sm:$0xff]
  %v36 = vld [vmem:[%s0 + $0xc8] sm:$0xff]
  %v37 = vld [vmem:[%s0 + $0xd0] sm:$0xff]
  %v38 = vld [vmem:[%s0 + $0xd8] sm:$0xff]
  %v39 = vld [vmem:[%s0 + $0xe0] sm:$0xff]
  %v40 = vld [vmem:[%s0 + $0xe8] sm:$0xff]
  %v41 = vld [vmem:[%s0 + $0xf0] sm:$0xff]
  %v42 = vld [vmem:[%s0 + $0xf8] sm:$0xff]
  %v43 = vld [vmem:[%s1] ss:$8 sm:$0x3]
  %s44 = scalar_lea.vmem %s1, 1
  %v45 = vld [vmem:[%s44] ss:$8 sm:$0x3]
  %v47 = vperm.slane %v43, 0
  %v48 = vperm.slane %v43, 1
  %v51 = vmul.f32 %v11, %v47
  %v52 = vmul.f32 %v12, %v48
  %v53 = vmul.f32 %v13, %v47
  %v54 = vmul.f32 %v14, %v48
  %v55 = vmul.f32 %v15, %v47
  %v56 = vmul.f32 %v16, %v48
  %v57 = vmul.f32 %v17, %v47
  %v58 = vmul.f32 %v18, %v48
  %v59 = vmul.f32 %v19, %v47
  %v60 = vmul.f32 %v20, %v48
  %v61 = vmul.f32 %v21, %v47
  %v62 = vmul.f32 %v22, %v48
  %v63 = vmul.f32 %v23, %v47
  %v64 = vmul.f32 %v24, %v48
  %v65 = vmul.f32 %v25, %v47
  %v66 = vmul.f32 %v26, %v48
  %v67 = vmul.f32 %v27, %v47
  %v68 = vmul.f32 %v28, %v48
  %v69 = vmul.f32 %v29, %v47
  %v70 = vmul.f32 %v30, %v48
  %v71 = vmul.f32 %v31, %v47
  %v72 = vmul.f32 %v32, %v48
  %v73 = vmul.f32 %v33, %v47
  %v74 = vmul.f32 %v34, %v48
  %v75 = vmul.f32 %v35, %v47
  %v76 = vmul.f32 %v36, %v48
  %v77 = vmul.f32 %v37, %v47
  %v78 = vmul.f32 %v38, %v48
  %v79 = vmul.f32 %v39, %v47
  %v80 = vmul.f32 %v40, %v48
  %v81 = vmul.f32 %v41, %v47
  %v82 = vmul.f32 %v42, %v48
  %v84 = vperm.slane %v45, 0
  %v85 = vperm.slane %v45, 1
  %v88 = vadd.f32 %v51, %v84
  %v89 = vadd.f32 %v52, %v85
  %v90 = vadd.f32 %v53, %v84
  %v91 = vadd.f32 %v54, %v85
  %v92 = vadd.f32 %v55, %v84
  %v93 = vadd.f32 %v56, %v85
  %v94 = vadd.f32 %v57, %v84
  %v95 = vadd.f32 %v58, %v85
  %v96 = vadd.f32 %v59, %v84
  %v97 = vadd.f32 %v60, %v85
  %v98 = vadd.f32 %v61, %v84
  %v99 = vadd.f32 %v62, %v85
  %v100 = vadd.f32 %v63, %v84
  %v101 = vadd.f32 %v64, %v85
  %v102 = vadd.f32 %v65, %v84
  %v103 = vadd.f32 %v66, %v85
  %v104 = vadd.f32 %v67, %v84
  %v105 = vadd.f32 %v68, %v85
  %v106 = vadd.f32 %v69, %v84
  %v107 = vadd.f32 %v70, %v85
  %v108 = vadd.f32 %v71, %v84
  %v109 = vadd.f32 %v72, %v85
  %v110 = vadd.f32 %v73, %v84
  %v111 = vadd.f32 %v74, %v85
  %v112 = vadd.f32 %v75, %v84
  %v113 = vadd.f32 %v76, %v85
  %v114 = vadd.f32 %v77, %v84
  %v115 = vadd.f32 %v78, %v85
  %v116 = vadd.f32 %v79, %v84
  %v117 = vadd.f32 %v80, %v85
  %v118 = vadd.f32 %v81, %v84
  %v119 = vadd.f32 %v82, %v85
  %v120 = vlaneseq
  %v121 = vand.u32 %v120, 127
  %v122 = vadd.s32 %v121, 128
  %vm123 = vcmp.ge.s32.totalorder %v121, 128
  %vm124 = vcmp.ge.s32.totalorder %v122, 128
  %vm125 = vcmp.lt.s32.totalorder %v121, 136
  %vm126 = vcmp.lt.s32.totalorder %v122, 136
  %vm127 = vmand %vm123, %vm125
  %vm128 = vmand %vm124, %vm126
  %v129 = vxor.u32 %v88, 2147483648
  %v130 = vxor.u32 %v89, 2147483648
  %v131 = vxor.u32 %v90, 2147483648
  %v132 = vxor.u32 %v91, 2147483648
  %v133 = vxor.u32 %v92, 2147483648
  %v134 = vxor.u32 %v93, 2147483648
  %v135 = vxor.u32 %v94, 2147483648
  %v136 = vxor.u32 %v95, 2147483648
  %v137 = vxor.u32 %v96, 2147483648
  %v138 = vxor.u32 %v97, 2147483648
  %v139 = vxor.u32 %v98, 2147483648
  %v140 = vxor.u32 %v99, 2147483648
  %v141 = vxor.u32 %v100, 2147483648
  %v142 = vxor.u32 %v101, 2147483648
  %v143 = vxor.u32 %v102, 2147483648
  %v144 = vxor.u32 %v103, 2147483648
  %v145 = vxor.u32 %v104, 2147483648
  %v146 = vxor.u32 %v105, 2147483648
  %v147 = vxor.u32 %v106, 2147483648
  %v148 = vxor.u32 %v107, 2147483648
  %v149 = vxor.u32 %v108, 2147483648
  %v150 = vxor.u32 %v109, 2147483648
  %v151 = vxor.u32 %v110, 2147483648
  %v152 = vxor.u32 %v111, 2147483648
  %v153 = vxor.u32 %v112, 2147483648
  %v154 = vxor.u32 %v113, 2147483648
  %v155 = vxor.u32 %v114, 2147483648
  %v156 = vxor.u32 %v115, 2147483648
  %v157 = vxor.u32 %v116, 2147483648
  %v158 = vxor.u32 %v117, 2147483648
  %v159 = vxor.u32 %v118, 2147483648
  %v160 = vxor.u32 %v119, 2147483648
  %v161 = vmul.f32 %v129, 1.442695
  %v162 = vpow.pop %v161
  %v163 = vmul.f32 %v130, 1.442695
  %v164 = vpow.pop %v163
  %v165 = vmul.f32 %v131, 1.442695
  %v166 = vpow.pop %v165
  %v167 = vmul.f32 %v132, 1.442695
  %v168 = vpow.pop %v167
  %v169 = vmul.f32 %v133, 1.442695
  %v170 = vpow.pop %v169
  %v171 = vmul.f32 %v134, 1.442695
  %v172 = vpow.pop %v171
  %v173 = vmul.f32 %v135, 1.442695
  %v174 = vpow.pop %v173
  %v175 = vmul.f32 %v136, 1.442695
  %v176 = vpow.pop %v175
  %v177 = vmul.f32 %v137, 1.442695
  %v178 = vpow.pop %v177
  %v179 = vmul.f32 %v138, 1.442695
  %v180 = vpow.pop %v179
  %v181 = vmul.f32 %v139, 1.442695
  %v182 = vpow.pop %v181
  %v183 = vmul.f32 %v140, 1.442695
  %v184 = vpow.pop %v183
  %v185 = vmul.f32 %v141, 1.442695
  %v186 = vpow.pop %v185
  %v187 = vmul.f32 %v142, 1.442695
  %v188 = vpow.pop %v187
  %v189 = vmul.f32 %v143, 1.442695
  %v190 = vpow.pop %v189
  %v191 = vmul.f32 %v144, 1.442695
  %v192 = vpow.pop %v191
  %v193 = vmul.f32 %v145, 1.442695
  %v194 = vpow.pop %v193
  %v195 = vmul.f32 %v146, 1.442695
  %v196 = vpow.pop %v195
  %v197 = vmul.f32 %v147, 1.442695
  %v198 = vpow.pop %v197
  %v199 = vmul.f32 %v148, 1.442695
  %v200 = vpow.pop %v199
  %v201 = vmul.f32 %v149, 1.442695
  %v202 = vpow.pop %v201
  %v203 = vmul.f32 %v150, 1.442695
  %v204 = vpow.pop %v203
  %v205 = vmul.f32 %v151, 1.442695
  %v206 = vpow.pop %v205
  %v207 = vmul.f32 %v152, 1.442695
  %v208 = vpow.pop %v207
  %v209 = vmul.f32 %v153, 1.442695
  %v210 = vpow.pop %v209
  %v211 = vmul.f32 %v154, 1.442695
  %v212 = vpow.pop %v211
  %v213 = vmul.f32 %v155, 1.442695
  %v214 = vpow.pop %v213
  %v215 = vmul.f32 %v156, 1.442695
  %v216 = vpow.pop %v215
  %v217 = vmul.f32 %v157, 1.442695
  %v218 = vpow.pop %v217
  %v219 = vmul.f32 %v158, 1.442695
  %v220 = vpow.pop %v219
  %v221 = vmul.f32 %v159, 1.442695
  %v222 = vpow.pop %v221
  %v223 = vmul.f32 %v160, 1.442695
  %v224 = vpow.pop %v223
  %v225 = vadd.f32 %v162, 1.0
  %v226 = vadd.f32 %v164, 1.0
  %v227 = vadd.f32 %v166, 1.0
  %v228 = vadd.f32 %v168, 1.0
  %v229 = vadd.f32 %v170, 1.0
  %v230 = vadd.f32 %v172, 1.0
  %v231 = vadd.f32 %v174, 1.0
  %v232 = vadd.f32 %v176, 1.0
  %v233 = vadd.f32 %v178, 1.0
  %v234 = vadd.f32 %v180, 1.0
  %v235 = vadd.f32 %v182, 1.0
  %v236 = vadd.f32 %v184, 1.0
  %v237 = vadd.f32 %v186, 1.0
  %v238 = vadd.f32 %v188, 1.0
  %v239 = vadd.f32 %v190, 1.0
  %v240 = vadd.f32 %v192, 1.0
  %v241 = vadd.f32 %v194, 1.0
  %v242 = vadd.f32 %v196, 1.0
  %v243 = vadd.f32 %v198, 1.0
  %v244 = vadd.f32 %v200, 1.0
  %v245 = vadd.f32 %v202, 1.0
  %v246 = vadd.f32 %v204, 1.0
  %v247 = vadd.f32 %v206, 1.0
  %v248 = vadd.f32 %v208, 1.0
  %v249 = vadd.f32 %v210, 1.0
  %v250 = vadd.f32 %v212, 1.0
  %v251 = vadd.f32 %v214, 1.0
  %v252 = vadd.f32 %v216, 1.0
  %v253 = vadd.f32 %v218, 1.0
  %v254 = vadd.f32 %v220, 1.0
  %v255 = vadd.f32 %v222, 1.0
  %v256 = vadd.f32 %v224, 1.0
  %v257 = vrcp.pop %v225
  %v258 = vmul.f32 %v225, %v257
  %v259 = vsub.f32 1.0, %v258
  %v260 = vmul.f32 %v257, %v259
  %v261 = vadd.f32 %v257, %v260
  %vm262 = vweird.f32 %v225
  %vm263 = vweird.f32 %v257
  %vm264 = vmor %vm262, %vm263
  %v265 = vsel %vm264, %v257, %v261
  %v266 = vand.u32 2147483647, %v225
  %vm267 = vcmp.eq.f32.partialorder %v266, 8.507059e+37
  %v268 = vand.u32 %v225, 2147483648
  %v269 = vor.u32 1.1754944e-38, %v268
  %v270 = vsel %vm267, %v269, %v265
  %v271 = vmul.f32 1.0, %v270
  %v272 = vrcp.pop %v226
  %v273 = vmul.f32 %v226, %v272
  %v274 = vsub.f32 1.0, %v273
  %v275 = vmul.f32 %v272, %v274
  %v276 = vadd.f32 %v272, %v275
  %vm277 = vweird.f32 %v226
  %vm278 = vweird.f32 %v272
  %vm279 = vmor %vm277, %vm278
  %v280 = vsel %vm279, %v272, %v276
  %v281 = vand.u32 2147483647, %v226
  %vm282 = vcmp.eq.f32.partialorder %v281, 8.507059e+37
  %v283 = vand.u32 %v226, 2147483648
  %v284 = vor.u32 1.1754944e-38, %v283
  %v285 = vsel %vm282, %v284, %v280
  %v286 = vmul.f32 1.0, %v285
  %v287 = vrcp.pop %v227
  %v288 = vmul.f32 %v227, %v287
  %v289 = vsub.f32 1.0, %v288
  %v290 = vmul.f32 %v287, %v289
  %v291 = vadd.f32 %v287, %v290
  %vm292 = vweird.f32 %v227
  %vm293 = vweird.f32 %v287
  %vm294 = vmor %vm292, %vm293
  %v295 = vsel %vm294, %v287, %v291
  %v296 = vand.u32 2147483647, %v227
  %vm297 = vcmp.eq.f32.partialorder %v296, 8.507059e+37
  %v298 = vand.u32 %v227, 2147483648
  %v299 = vor.u32 1.1754944e-38, %v298
  %v300 = vsel %vm297, %v299, %v295
  %v301 = vmul.f32 1.0, %v300
  %v302 = vrcp.pop %v228
  %v303 = vmul.f32 %v228, %v302
  %v304 = vsub.f32 1.0, %v303
  %v305 = vmul.f32 %v302, %v304
  %v306 = vadd.f32 %v302, %v305
  %vm307 = vweird.f32 %v228
  %vm308 = vweird.f32 %v302
  %vm309 = vmor %vm307, %vm308
  %v310 = vsel %vm309, %v302, %v306
  %v311 = vand.u32 2147483647, %v228
  %vm312 = vcmp.eq.f32.partialorder %v311, 8.507059e+37
  %v313 = vand.u32 %v228, 2147483648
  %v314 = vor.u32 1.1754944e-38, %v313
  %v315 = vsel %vm312, %v314, %v310
  %v316 = vmul.f32 1.0, %v315
  %v317 = vrcp.pop %v229
  %v318 = vmul.f32 %v229, %v317
  %v319 = vsub.f32 1.0, %v318
  %v320 = vmul.f32 %v317, %v319
  %v321 = vadd.f32 %v317, %v320
  %vm322 = vweird.f32 %v229
  %vm323 = vweird.f32 %v317
  %vm324 = vmor %vm322, %vm323
  %v325 = vsel %vm324, %v317, %v321
  %v326 = vand.u32 2147483647, %v229
  %vm327 = vcmp.eq.f32.partialorder %v326, 8.507059e+37
  %v328 = vand.u32 %v229, 2147483648
  %v329 = vor.u32 1.1754944e-38, %v328
  %v330 = vsel %vm327, %v329, %v325
  %v331 = vmul.f32 1.0, %v330
  %v332 = vrcp.pop %v230
  %v333 = vmul.f32 %v230, %v332
  %v334 = vsub.f32 1.0, %v333
  %v335 = vmul.f32 %v332, %v334
  %v336 = vadd.f32 %v332, %v335
  %vm337 = vweird.f32 %v230
  %vm338 = vweird.f32 %v332
  %vm339 = vmor %vm337, %vm338
  %v340 = vsel %vm339, %v332, %v336
  %v341 = vand.u32 2147483647, %v230
  %vm342 = vcmp.eq.f32.partialorder %v341, 8.507059e+37
  %v343 = vand.u32 %v230, 2147483648
  %v344 = vor.u32 1.1754944e-38, %v343
  %v345 = vsel %vm342, %v344, %v340
  %v346 = vmul.f32 1.0, %v345
  %v347 = vrcp.pop %v231
  %v348 = vmul.f32 %v231, %v347
  %v349 = vsub.f32 1.0, %v348
  %v350 = vmul.f32 %v347, %v349
  %v351 = vadd.f32 %v347, %v350
  %vm352 = vweird.f32 %v231
  %vm353 = vweird.f32 %v347
  %vm354 = vmor %vm352, %vm353
  %v355 = vsel %vm354, %v347, %v351
  %v356 = vand.u32 2147483647, %v231
  %vm357 = vcmp.eq.f32.partialorder %v356, 8.507059e+37
  %v358 = vand.u32 %v231, 2147483648
  %v359 = vor.u32 1.1754944e-38, %v358
  %v360 = vsel %vm357, %v359, %v355
  %v361 = vmul.f32 1.0, %v360
  %v362 = vrcp.pop %v232
  %v363 = vmul.f32 %v232, %v362
  %v364 = vsub.f32 1.0, %v363
  %v365 = vmul.f32 %v362, %v364
  %v366 = vadd.f32 %v362, %v365
  %vm367 = vweird.f32 %v232
  %vm368 = vweird.f32 %v362
  %vm369 = vmor %vm367, %vm368
  %v370 = vsel %vm369, %v362, %v366
  %v371 = vand.u32 2147483647, %v232
  %vm372 = vcmp.eq.f32.partialorder %v371, 8.507059e+37
  %v373 = vand.u32 %v232, 2147483648
  %v374 = vor.u32 1.1754944e-38, %v373
  %v375 = vsel %vm372, %v374, %v370
  %v376 = vmul.f32 1.0, %v375
  %v377 = vrcp.pop %v233
  %v378 = vmul.f32 %v233, %v377
  %v379 = vsub.f32 1.0, %v378
  %v380 = vmul.f32 %v377, %v379
  %v381 = vadd.f32 %v377, %v380
  %vm382 = vweird.f32 %v233
  %vm383 = vweird.f32 %v377
  %vm384 = vmor %vm382, %vm383
  %v385 = vsel %vm384, %v377, %v381
  %v386 = vand.u32 2147483647, %v233
  %vm387 = vcmp.eq.f32.partialorder %v386, 8.507059e+37
  %v388 = vand.u32 %v233, 2147483648
  %v389 = vor.u32 1.1754944e-38, %v388
  %v390 = vsel %vm387, %v389, %v385
  %v391 = vmul.f32 1.0, %v390
  %v392 = vrcp.pop %v234
  %v393 = vmul.f32 %v234, %v392
  %v394 = vsub.f32 1.0, %v393
  %v395 = vmul.f32 %v392, %v394
  %v396 = vadd.f32 %v392, %v395
  %vm397 = vweird.f32 %v234
  %vm398 = vweird.f32 %v392
  %vm399 = vmor %vm397, %vm398
  %v400 = vsel %vm399, %v392, %v396
  %v401 = vand.u32 2147483647, %v234
  %vm402 = vcmp.eq.f32.partialorder %v401, 8.507059e+37
  %v403 = vand.u32 %v234, 2147483648
  %v404 = vor.u32 1.1754944e-38, %v403
  %v405 = vsel %vm402, %v404, %v400
  %v406 = vmul.f32 1.0, %v405
  %v407 = vrcp.pop %v235
  %v408 = vmul.f32 %v235, %v407
  %v409 = vsub.f32 1.0, %v408
  %v410 = vmul.f32 %v407, %v409
  %v411 = vadd.f32 %v407, %v410
  %vm412 = vweird.f32 %v235
  %vm413 = vweird.f32 %v407
  %vm414 = vmor %vm412, %vm413
  %v415 = vsel %vm414, %v407, %v411
  %v416 = vand.u32 2147483647, %v235
  %vm417 = vcmp.eq.f32.partialorder %v416, 8.507059e+37
  %v418 = vand.u32 %v235, 2147483648
  %v419 = vor.u32 1.1754944e-38, %v418
  %v420 = vsel %vm417, %v419, %v415
  %v421 = vmul.f32 1.0, %v420
  %v422 = vrcp.pop %v236
  %v423 = vmul.f32 %v236, %v422
  %v424 = vsub.f32 1.0, %v423
  %v425 = vmul.f32 %v422, %v424
  %v426 = vadd.f32 %v422, %v425
  %vm427 = vweird.f32 %v236
  %vm428 = vweird.f32 %v422
  %vm429 = vmor %vm427, %vm428
  %v430 = vsel %vm429, %v422, %v426
  %v431 = vand.u32 2147483647, %v236
  %vm432 = vcmp.eq.f32.partialorder %v431, 8.507059e+37
  %v433 = vand.u32 %v236, 2147483648
  %v434 = vor.u32 1.1754944e-38, %v433
  %v435 = vsel %vm432, %v434, %v430
  %v436 = vmul.f32 1.0, %v435
  %v437 = vrcp.pop %v237
  %v438 = vmul.f32 %v237, %v437
  %v439 = vsub.f32 1.0, %v438
  %v440 = vmul.f32 %v437, %v439
  %v441 = vadd.f32 %v437, %v440
  %vm442 = vweird.f32 %v237
  %vm443 = vweird.f32 %v437
  %vm444 = vmor %vm442, %vm443
  %v445 = vsel %vm444, %v437, %v441
  %v446 = vand.u32 2147483647, %v237
  %vm447 = vcmp.eq.f32.partialorder %v446, 8.507059e+37
  %v448 = vand.u32 %v237, 2147483648
  %v449 = vor.u32 1.1754944e-38, %v448
  %v450 = vsel %vm447, %v449, %v445
  %v451 = vmul.f32 1.0, %v450
  %v452 = vrcp.pop %v238
  %v453 = vmul.f32 %v238, %v452
  %v454 = vsub.f32 1.0, %v453
  %v455 = vmul.f32 %v452, %v454
  %v456 = vadd.f32 %v452, %v455
  %vm457 = vweird.f32 %v238
  %vm458 = vweird.f32 %v452
  %vm459 = vmor %vm457, %vm458
  %v460 = vsel %vm459, %v452, %v456
  %v461 = vand.u32 2147483647, %v238
  %vm462 = vcmp.eq.f32.partialorder %v461, 8.507059e+37
  %v463 = vand.u32 %v238, 2147483648
  %v464 = vor.u32 1.1754944e-38, %v463
  %v465 = vsel %vm462, %v464, %v460
  %v466 = vmul.f32 1.0, %v465
  %v467 = vrcp.pop %v239
  %v468 = vmul.f32 %v239, %v467
  %v469 = vsub.f32 1.0, %v468
  %v470 = vmul.f32 %v467, %v469
  %v471 = vadd.f32 %v467, %v470
  %vm472 = vweird.f32 %v239
  %vm473 = vweird.f32 %v467
  %vm474 = vmor %vm472, %vm473
  %v475 = vsel %vm474, %v467, %v471
  %v476 = vand.u32 2147483647, %v239
  %vm477 = vcmp.eq.f32.partialorder %v476, 8.507059e+37
  %v478 = vand.u32 %v239, 2147483648
  %v479 = vor.u32 1.1754944e-38, %v478
  %v480 = vsel %vm477, %v479, %v475
  %v481 = vmul.f32 1.0, %v480
  %v482 = vrcp.pop %v240
  %v483 = vmul.f32 %v240, %v482
  %v484 = vsub.f32 1.0, %v483
  %v485 = vmul.f32 %v482, %v484
  %v486 = vadd.f32 %v482, %v485
  %vm487 = vweird.f32 %v240
  %vm488 = vweird.f32 %v482
  %vm489 = vmor %vm487, %vm488
  %v490 = vsel %vm489, %v482, %v486
  %v491 = vand.u32 2147483647, %v240
  %vm492 = vcmp.eq.f32.partialorder %v491, 8.507059e+37
  %v493 = vand.u32 %v240, 2147483648
  %v494 = vor.u32 1.1754944e-38, %v493
  %v495 = vsel %vm492, %v494, %v490
  %v496 = vmul.f32 1.0, %v495
  %v497 = vrcp.pop %v241
  %v498 = vmul.f32 %v241, %v497
  %v499 = vsub.f32 1.0, %v498
  %v500 = vmul.f32 %v497, %v499
  %v501 = vadd.f32 %v497, %v500
  %vm502 = vweird.f32 %v241
  %vm503 = vweird.f32 %v497
  %vm504 = vmor %vm502, %vm503
  %v505 = vsel %vm504, %v497, %v501
  %v506 = vand.u32 2147483647, %v241
  %vm507 = vcmp.eq.f32.partialorder %v506, 8.507059e+37
  %v508 = vand.u32 %v241, 2147483648
  %v509 = vor.u32 1.1754944e-38, %v508
  %v510 = vsel %vm507, %v509, %v505
  %v511 = vmul.f32 1.0, %v510
  %v512 = vrcp.pop %v242
  %v513 = vmul.f32 %v242, %v512
  %v514 = vsub.f32 1.0, %v513
  %v515 = vmul.f32 %v512, %v514
  %v516 = vadd.f32 %v512, %v515
  %vm517 = vweird.f32 %v242
  %vm518 = vweird.f32 %v512
  %vm519 = vmor %vm517, %vm518
  %v520 = vsel %vm519, %v512, %v516
  %v521 = vand.u32 2147483647, %v242
  %vm522 = vcmp.eq.f32.partialorder %v521, 8.507059e+37
  %v523 = vand.u32 %v242, 2147483648
  %v524 = vor.u32 1.1754944e-38, %v523
  %v525 = vsel %vm522, %v524, %v520
  %v526 = vmul.f32 1.0, %v525
  %v527 = vrcp.pop %v243
  %v528 = vmul.f32 %v243, %v527
  %v529 = vsub.f32 1.0, %v528
  %v530 = vmul.f32 %v527, %v529
  %v531 = vadd.f32 %v527, %v530
  %vm532 = vweird.f32 %v243
  %vm533 = vweird.f32 %v527
  %vm534 = vmor %vm532, %vm533
  %v535 = vsel %vm534, %v527, %v531
  %v536 = vand.u32 2147483647, %v243
  %vm537 = vcmp.eq.f32.partialorder %v536, 8.507059e+37
  %v538 = vand.u32 %v243, 2147483648
  %v539 = vor.u32 1.1754944e-38, %v538
  %v540 = vsel %vm537, %v539, %v535
  %v541 = vmul.f32 1.0, %v540
  %v542 = vrcp.pop %v244
  %v543 = vmul.f32 %v244, %v542
  %v544 = vsub.f32 1.0, %v543
  %v545 = vmul.f32 %v542, %v544
  %v546 = vadd.f32 %v542, %v545
  %vm547 = vweird.f32 %v244
  %vm548 = vweird.f32 %v542
  %vm549 = vmor %vm547, %vm548
  %v550 = vsel %vm549, %v542, %v546
  %v551 = vand.u32 2147483647, %v244
  %vm552 = vcmp.eq.f32.partialorder %v551, 8.507059e+37
  %v553 = vand.u32 %v244, 2147483648
  %v554 = vor.u32 1.1754944e-38, %v553
  %v555 = vsel %vm552, %v554, %v550
  %v556 = vmul.f32 1.0, %v555
  %v557 = vrcp.pop %v245
  %v558 = vmul.f32 %v245, %v557
  %v559 = vsub.f32 1.0, %v558
  %v560 = vmul.f32 %v557, %v559
  %v561 = vadd.f32 %v557, %v560
  %vm562 = vweird.f32 %v245
  %vm563 = vweird.f32 %v557
  %vm564 = vmor %vm562, %vm563
  %v565 = vsel %vm564, %v557, %v561
  %v566 = vand.u32 2147483647, %v245
  %vm567 = vcmp.eq.f32.partialorder %v566, 8.507059e+37
  %v568 = vand.u32 %v245, 2147483648
  %v569 = vor.u32 1.1754944e-38, %v568
  %v570 = vsel %vm567, %v569, %v565
  %v571 = vmul.f32 1.0, %v570
  %v572 = vrcp.pop %v246
  %v573 = vmul.f32 %v246, %v572
  %v574 = vsub.f32 1.0, %v573
  %v575 = vmul.f32 %v572, %v574
  %v576 = vadd.f32 %v572, %v575
  %vm577 = vweird.f32 %v246
  %vm578 = vweird.f32 %v572
  %vm579 = vmor %vm577, %vm578
  %v580 = vsel %vm579, %v572, %v576
  %v581 = vand.u32 2147483647, %v246
  %vm582 = vcmp.eq.f32.partialorder %v581, 8.507059e+37
  %v583 = vand.u32 %v246, 2147483648
  %v584 = vor.u32 1.1754944e-38, %v583
  %v585 = vsel %vm582, %v584, %v580
  %v586 = vmul.f32 1.0, %v585
  %v587 = vrcp.pop %v247
  %v588 = vmul.f32 %v247, %v587
  %v589 = vsub.f32 1.0, %v588
  %v590 = vmul.f32 %v587, %v589
  %v591 = vadd.f32 %v587, %v590
  %vm592 = vweird.f32 %v247
  %vm593 = vweird.f32 %v587
  %vm594 = vmor %vm592, %vm593
  %v595 = vsel %vm594, %v587, %v591
  %v596 = vand.u32 2147483647, %v247
  %vm597 = vcmp.eq.f32.partialorder %v596, 8.507059e+37
  %v598 = vand.u32 %v247, 2147483648
  %v599 = vor.u32 1.1754944e-38, %v598
  %v600 = vsel %vm597, %v599, %v595
  %v601 = vmul.f32 1.0, %v600
  %v602 = vrcp.pop %v248
  %v603 = vmul.f32 %v248, %v602
  %v604 = vsub.f32 1.0, %v603
  %v605 = vmul.f32 %v602, %v604
  %v606 = vadd.f32 %v602, %v605
  %vm607 = vweird.f32 %v248
  %vm608 = vweird.f32 %v602
  %vm609 = vmor %vm607, %vm608
  %v610 = vsel %vm609, %v602, %v606
  %v611 = vand.u32 2147483647, %v248
  %vm612 = vcmp.eq.f32.partialorder %v611, 8.507059e+37
  %v613 = vand.u32 %v248, 2147483648
  %v614 = vor.u32 1.1754944e-38, %v613
  %v615 = vsel %vm612, %v614, %v610
  %v616 = vmul.f32 1.0, %v615
  %v617 = vrcp.pop %v249
  %v618 = vmul.f32 %v249, %v617
  %v619 = vsub.f32 1.0, %v618
  %v620 = vmul.f32 %v617, %v619
  %v621 = vadd.f32 %v617, %v620
  %vm622 = vweird.f32 %v249
  %vm623 = vweird.f32 %v617
  %vm624 = vmor %vm622, %vm623
  %v625 = vsel %vm624, %v617, %v621
  %v626 = vand.u32 2147483647, %v249
  %vm627 = vcmp.eq.f32.partialorder %v626, 8.507059e+37
  %v628 = vand.u32 %v249, 2147483648
  %v629 = vor.u32 1.1754944e-38, %v628
  %v630 = vsel %vm627, %v629, %v625
  %v631 = vmul.f32 1.0, %v630
  %v632 = vrcp.pop %v250
  %v633 = vmul.f32 %v250, %v632
  %v634 = vsub.f32 1.0, %v633
  %v635 = vmul.f32 %v632, %v634
  %v636 = vadd.f32 %v632, %v635
  %vm637 = vweird.f32 %v250
  %vm638 = vweird.f32 %v632
  %vm639 = vmor %vm637, %vm638
  %v640 = vsel %vm639, %v632, %v636
  %v641 = vand.u32 2147483647, %v250
  %vm642 = vcmp.eq.f32.partialorder %v641, 8.507059e+37
  %v643 = vand.u32 %v250, 2147483648
  %v644 = vor.u32 1.1754944e-38, %v643
  %v645 = vsel %vm642, %v644, %v640
  %v646 = vmul.f32 1.0, %v645
  %v647 = vrcp.pop %v251
  %v648 = vmul.f32 %v251, %v647
  %v649 = vsub.f32 1.0, %v648
  %v650 = vmul.f32 %v647, %v649
  %v651 = vadd.f32 %v647, %v650
  %vm652 = vweird.f32 %v251
  %vm653 = vweird.f32 %v647
  %vm654 = vmor %vm652, %vm653
  %v655 = vsel %vm654, %v647, %v651
  %v656 = vand.u32 2147483647, %v251
  %vm657 = vcmp.eq.f32.partialorder %v656, 8.507059e+37
  %v658 = vand.u32 %v251, 2147483648
  %v659 = vor.u32 1.1754944e-38, %v658
  %v660 = vsel %vm657, %v659, %v655
  %v661 = vmul.f32 1.0, %v660
  %v662 = vrcp.pop %v252
  %v663 = vmul.f32 %v252, %v662
  %v664 = vsub.f32 1.0, %v663
  %v665 = vmul.f32 %v662, %v664
  %v666 = vadd.f32 %v662, %v665
  %vm667 = vweird.f32 %v252
  %vm668 = vweird.f32 %v662
  %vm669 = vmor %vm667, %vm668
  %v670 = vsel %vm669, %v662, %v666
  %v671 = vand.u32 2147483647, %v252
  %vm672 = vcmp.eq.f32.partialorder %v671, 8.507059e+37
  %v673 = vand.u32 %v252, 2147483648
  %v674 = vor.u32 1.1754944e-38, %v673
  %v675 = vsel %vm672, %v674, %v670
  %v676 = vmul.f32 1.0, %v675
  %v677 = vrcp.pop %v253
  %v678 = vmul.f32 %v253, %v677
  %v679 = vsub.f32 1.0, %v678
  %v680 = vmul.f32 %v677, %v679
  %v681 = vadd.f32 %v677, %v680
  %vm682 = vweird.f32 %v253
  %vm683 = vweird.f32 %v677
  %vm684 = vmor %vm682, %vm683
  %v685 = vsel %vm684, %v677, %v681
  %v686 = vand.u32 2147483647, %v253
  %vm687 = vcmp.eq.f32.partialorder %v686, 8.507059e+37
  %v688 = vand.u32 %v253, 2147483648
  %v689 = vor.u32 1.1754944e-38, %v688
  %v690 = vsel %vm687, %v689, %v685
  %v691 = vmul.f32 1.0, %v690
  %v692 = vrcp.pop %v254
  %v693 = vmul.f32 %v254, %v692
  %v694 = vsub.f32 1.0, %v693
  %v695 = vmul.f32 %v692, %v694
  %v696 = vadd.f32 %v692, %v695
  %vm697 = vweird.f32 %v254
  %vm698 = vweird.f32 %v692
  %vm699 = vmor %vm697, %vm698
  %v700 = vsel %vm699, %v692, %v696
  %v701 = vand.u32 2147483647, %v254
  %vm702 = vcmp.eq.f32.partialorder %v701, 8.507059e+37
  %v703 = vand.u32 %v254, 2147483648
  %v704 = vor.u32 1.1754944e-38, %v703
  %v705 = vsel %vm702, %v704, %v700
  %v706 = vmul.f32 1.0, %v705
  %v707 = vrcp.pop %v255
  %v708 = vmul.f32 %v255, %v707
  %v709 = vsub.f32 1.0, %v708
  %v710 = vmul.f32 %v707, %v709
  %v711 = vadd.f32 %v707, %v710
  %vm712 = vweird.f32 %v255
  %vm713 = vweird.f32 %v707
  %vm714 = vmor %vm712, %vm713
  %v715 = vsel %vm714, %v707, %v711
  %v716 = vand.u32 2147483647, %v255
  %vm717 = vcmp.eq.f32.partialorder %v716, 8.507059e+37
  %v718 = vand.u32 %v255, 2147483648
  %v719 = vor.u32 1.1754944e-38, %v718
  %v720 = vsel %vm717, %v719, %v715
  %v721 = vmul.f32 1.0, %v720
  %v722 = vrcp.pop %v256
  %v723 = vmul.f32 %v256, %v722
  %v724 = vsub.f32 1.0, %v723
  %v725 = vmul.f32 %v722, %v724
  %v726 = vadd.f32 %v722, %v725
  %vm727 = vweird.f32 %v256
  %vm728 = vweird.f32 %v722
  %vm729 = vmor %vm727, %vm728
  %v730 = vsel %vm729, %v722, %v726
  %v731 = vand.u32 2147483647, %v256
  %vm732 = vcmp.eq.f32.partialorder %v731, 8.507059e+37
  %v733 = vand.u32 %v256, 2147483648
  %v734 = vor.u32 1.1754944e-38, %v733
  %v735 = vsel %vm732, %v734, %v730
  %v736 = vmul.f32 1.0, %v735
  %v737 = vsel %vm127, %v271, %v88
  %v738 = vsel %vm128, %v286, %v89
  %v739 = vsel %vm127, %v301, %v90
  %v740 = vsel %vm128, %v316, %v91
  %v741 = vsel %vm127, %v331, %v92
  %v742 = vsel %vm128, %v346, %v93
  %v743 = vsel %vm127, %v361, %v94
  %v744 = vsel %vm128, %v376, %v95
  %v745 = vsel %vm127, %v391, %v96
  %v746 = vsel %vm128, %v406, %v97
  %v747 = vsel %vm127, %v421, %v98
  %v748 = vsel %vm128, %v436, %v99
  %v749 = vsel %vm127, %v451, %v100
  %v750 = vsel %vm128, %v466, %v101
  %v751 = vsel %vm127, %v481, %v102
  %v752 = vsel %vm128, %v496, %v103
  %v753 = vsel %vm127, %v511, %v104
  %v754 = vsel %vm128, %v526, %v105
  %v755 = vsel %vm127, %v541, %v106
  %v756 = vsel %vm128, %v556, %v107
  %v757 = vsel %vm127, %v571, %v108
  %v758 = vsel %vm128, %v586, %v109
  %v759 = vsel %vm127, %v601, %v110
  %v760 = vsel %vm128, %v616, %v111
  %v761 = vsel %vm127, %v631, %v112
  %v762 = vsel %vm128, %v646, %v113
  %v763 = vsel %vm127, %v661, %v114
  %v764 = vsel %vm128, %v676, %v115
  %v765 = vsel %vm127, %v691, %v116
  %v766 = vsel %vm128, %v706, %v117
  %v767 = vsel %vm127, %v721, %v118
  %v768 = vsel %vm128, %v736, %v119
  %769 = vst [vmem:[%s2] sm:$0xff] %v737
  %770 = vst [vmem:[%s2 + $0x8] sm:$0xff] %v738
  %771 = vst [vmem:[%s2 + $0x10] sm:$0xff] %v739
  %772 = vst [vmem:[%s2 + $0x18] sm:$0xff] %v740
  %773 = vst [vmem:[%s2 + $0x20] sm:$0xff] %v741
  %774 = vst [vmem:[%s2 + $0x28] sm:$0xff] %v742
  %775 = vst [vmem:[%s2 + $0x30] sm:$0xff] %v743
  %776 = vst [vmem:[%s2 + $0x38] sm:$0xff] %v744
  %777 = vst [vmem:[%s2 + $0x40] sm:$0xff] %v745
  %778 = vst [vmem:[%s2 + $0x48] sm:$0xff] %v746
  %779 = vst [vmem:[%s2 + $0x50] sm:$0xff] %v747
  %780 = vst [vmem:[%s2 + $0x58] sm:$0xff] %v748
  %781 = vst [vmem:[%s2 + $0x60] sm:$0xff] %v749
  %782 = vst [vmem:[%s2 + $0x68] sm:$0xff] %v750
  %783 = vst [vmem:[%s2 + $0x70] sm:$0xff] %v751
  %784 = vst [vmem:[%s2 + $0x78] sm:$0xff] %v752
  %785 = vst [vmem:[%s2 + $0x80] sm:$0xff] %v753
  %786 = vst [vmem:[%s2 + $0x88] sm:$0xff] %v754
  %787 = vst [vmem:[%s2 + $0x90] sm:$0xff] %v755
  %788 = vst [vmem:[%s2 + $0x98] sm:$0xff] %v756
  %789 = vst [vmem:[%s2 + $0xa0] sm:$0xff] %v757
  %790 = vst [vmem:[%s2 + $0xa8] sm:$0xff] %v758
  %791 = vst [vmem:[%s2 + $0xb0] sm:$0xff] %v759
  %792 = vst [vmem:[%s2 + $0xb8] sm:$0xff] %v760
  %793 = vst [vmem:[%s2 + $0xc0] sm:$0xff] %v761
  %794 = vst [vmem:[%s2 + $0xc8] sm:$0xff] %v762
  %795 = vst [vmem:[%s2 + $0xd0] sm:$0xff] %v763
  %796 = vst [vmem:[%s2 + $0xd8] sm:$0xff] %v764
  %797 = vst [vmem:[%s2 + $0xe0] sm:$0xff] %v765
  %798 = vst [vmem:[%s2 + $0xe8] sm:$0xff] %v766
  %799 = vst [vmem:[%s2 + $0xf0] sm:$0xff] %v767
  %800 = vst [vmem:[%s2 + $0xf8] sm:$0xff] %v768
  // Predicated region
  $region10: #{_forward_impl.3} parent=0 // pred_check
    _
  $region11: #{_forward_impl.3} parent=0 // pred_check_branch
    %802 = sbr.rel (0) target = $region13
  $region12: #{_forward_impl.3} parent=0 // pred_region
    _
  $region13: #{_forward_impl.3} parent=0 // pred_fallthru
    _
  // Predicated region
  $region14: #{_forward_impl.3} parent=0 // pred_check
    _
  $region15: #{_forward_impl.3} parent=0 // pred_check_branch
    %804 = sbr.rel (0) target = $region17
  $region16: #{_forward_impl.3} parent=0 // pred_region
    _
  $region17: #{_forward_impl.3} parent=0 // pred_fallthru
    _

// kernel: _forward_impl.2
$region0: #{_forward_impl.2}
  #allocation0 [shape = 'u32[]', space=smem, size = 0x4, offset = 0x4, fixed_abs, tag = 'smem constant byte address 0x4 - core index']
  #allocation1 [shape = 'u32[72,128]{1,0:T(1,128)}', space=vmem, size = 0x9000, scoped, tag = 'internal scratch']
  %s0 = inlined_call_operand.vmem [shape: bf16[128,128], index: 0, kind: input, shape index: {}]
  %s1 = inlined_call_operand.vmem [shape: bf16[128,256], index: 1, kind: input, shape index: {}]
  %s2 = inlined_call_operand.vmem [shape: f32[128,256], index: 2, kind: output, shape index: {0}]
  %s3 = inlined_call_operand.vmem [shape: f32[8,256], index: 3, kind: output, shape index: {1}]
  %4 = xla_tuple %s2, %s3
  %s5 = sld [smem:[#allocation0]]
  $region26: #{_forward_impl.2} parent=0
    _
  %s7 = ssub.s32 1, %s5
  %s8 = scalar_select 0, %s7, %s5
  // Predicated region
  $region2: #{_forward_impl.2} parent=0 // pred_check
    _
  $region3: #{_forward_impl.2} parent=0 // pred_check_branch
    %10 = sbr.rel (0) target = $region5
  $region4: #{_forward_impl.2} parent=0 // pred_region
    _
  $region5: #{_forward_impl.2} parent=0 // pred_fallthru
    _
  // Predicated region
  $region6: #{_forward_impl.2} parent=0 // pred_check
    _
  $region7: #{_forward_impl.2} parent=0 // pred_check_branch
    %12 = sbr.rel (0) target = $region9
  $region8: #{_forward_impl.2} parent=0 // pred_region
    _
  $region9: #{_forward_impl.2} parent=0 // pred_fallthru
    _
  %v13 = vld [vmem:[%s0] sm:$0xf]
  %v14 = vld [vmem:[%s0 + $0x4] sm:$0xf]
  %v15 = vld [vmem:[%s0 + $0x8] sm:$0xf]
  %v16 = vld [vmem:[%s0 + $0xc] sm:$0xf]
  %v17 = vld [vmem:[%s0 + $0x10] sm:$0xf]
  %v18 = vld [vmem:[%s0 + $0x14] sm:$0xf]
  %v19 = vld [vmem:[%s0 + $0x18] sm:$0xf]
  %v20 = vld [vmem:[%s0 + $0x1c] sm:$0xf]
  %v21 = vld [vmem:[%s0 + $0x20] sm:$0xf]
  %v22 = vld [vmem:[%s0 + $0x24] sm:$0xf]
  %v23 = vld [vmem:[%s0 + $0x28] sm:$0xf]
  %v24 = vld [vmem:[%s0 + $0x2c] sm:$0xf]
  %v25 = vld [vmem:[%s0 + $0x30] sm:$0xf]
  %v26 = vld [vmem:[%s0 + $0x34] sm:$0xf]
  %v27 = vld [vmem:[%s0 + $0x38] sm:$0xf]
  %v28 = vld [vmem:[%s0 + $0x3c] sm:$0xf]
  %v29 = vld [vmem:[%s1] sm:$0xff]
  %v30 = vld [vmem:[%s1 + $0x8] sm:$0xff]
  %v31 = vld [vmem:[%s1 + $0x10] sm:$0xff]
  %v32 = vld [vmem:[%s1 + $0x18] sm:$0xff]
  %v33 = vld [vmem:[%s1 + $0x20] sm:$0xff]
  %v34 = vld [vmem:[%s1 + $0x28] sm:$0xff]
  %v35 = vld [vmem:[%s1 + $0x30] sm:$0xff]
  %v36 = vld [vmem:[%s1 + $0x38] sm:$0xff]
  %v37 = vld [vmem:[%s1 + $0x40] sm:$0xff]
  %v38 = vld [vmem:[%s1 + $0x48] sm:$0xff]
  %v39 = vld [vmem:[%s1 + $0x50] sm:$0xff]
  %v40 = vld [vmem:[%s1 + $0x58] sm:$0xff]
  %v41 = vld [vmem:[%s1 + $0x60] sm:$0xff]
  %v42 = vld [vmem:[%s1 + $0x68] sm:$0xff]
  %v43 = vld [vmem:[%s1 + $0x70] sm:$0xff]
  %v44 = vld [vmem:[%s1 + $0x78] sm:$0xff]
  %v61 = vunpack.c.l.b16 %v13
  %v62 = vunpack.c.l.b16 %v14
  %v63 = vunpack.c.l.b16 %v15
  %v64 = vunpack.c.l.b16 %v16
  %v65 = vunpack.c.l.b16 %v17
  %v66 = vunpack.c.l.b16 %v18
  %v67 = vunpack.c.l.b16 %v19
  %v68 = vunpack.c.l.b16 %v20
  %v69 = vunpack.c.l.b16 %v21
  %v70 = vunpack.c.l.b16 %v22
  %v71 = vunpack.c.l.b16 %v23
  %v72 = vunpack.c.l.b16 %v24
  %v73 = vunpack.c.l.b16 %v25
  %v74 = vunpack.c.l.b16 %v26
  %v75 = vunpack.c.l.b16 %v27
  %v76 = vunpack.c.l.b16 %v28
  %v77 = vpack.c.b16 %v62, %v61
  %v78 = vpack.c.b16 %v64, %v63
  %v79 = vpack.c.b16 %v66, %v65
  %v80 = vpack.c.b16 %v68, %v67
  %v81 = vpack.c.b16 %v70, %v69
  %v82 = vpack.c.b16 %v72, %v71
  %v83 = vpack.c.b16 %v74, %v73
  %v84 = vpack.c.b16 %v76, %v75
  %v109 = vunpack.c.l.b16 %v29
  %v110 = vunpack.c.h.b16 %v29
  %v111 = vunpack.c.l.b16 %v30
  %v112 = vunpack.c.h.b16 %v30
  %v113 = vunpack.c.l.b16 %v31
  %v114 = vunpack.c.h.b16 %v31
  %v115 = vunpack.c.l.b16 %v32
  %v116 = vunpack.c.h.b16 %v32
  %v117 = vunpack.c.l.b16 %v33
  %v118 = vunpack.c.h.b16 %v33
  %v119 = vunpack.c.l.b16 %v34
  %v120 = vunpack.c.h.b16 %v34
  %v121 = vunpack.c.l.b16 %v35
  %v122 = vunpack.c.h.b16 %v35
  %v123 = vunpack.c.l.b16 %v36
  %v124 = vunpack.c.h.b16 %v36
  %v125 = vunpack.c.l.b16 %v37
  %v126 = vunpack.c.h.b16 %v37
  %v127 = vunpack.c.l.b16 %v38
  %v128 = vunpack.c.h.b16 %v38
  %v129 = vunpack.c.l.b16 %v39
  %v130 = vunpack.c.h.b16 %v39
  %v131 = vunpack.c.l.b16 %v40
  %v132 = vunpack.c.h.b16 %v40
  %v133 = vunpack.c.l.b16 %v41
  %v134 = vunpack.c.h.b16 %v41
  %v135 = vunpack.c.l.b16 %v42
  %v136 = vunpack.c.h.b16 %v42
  %v137 = vunpack.c.l.b16 %v43
  %v138 = vunpack.c.h.b16 %v43
  %v139 = vunpack.c.l.b16 %v44
  %v140 = vunpack.c.h.b16 %v44
  %v141 = vpack.c.b16 %v111, %v109
  %v142 = vpack.c.b16 %v112, %v110
  %v143 = vpack.c.b16 %v115, %v113
  %v144 = vpack.c.b16 %v116, %v114
  %v145 = vpack.c.b16 %v119, %v117
  %v146 = vpack.c.b16 %v120, %v118
  %v147 = vpack.c.b16 %v123, %v121
  %v148 = vpack.c.b16 %v124, %v122
  %v149 = vpack.c.b16 %v127, %v125
  %v150 = vpack.c.b16 %v128, %v126
  %v151 = vpack.c.b16 %v131, %v129
  %v152 = vpack.c.b16 %v132, %v130
  %v153 = vpack.c.b16 %v135, %v133
  %v154 = vpack.c.b16 %v136, %v134
  %v155 = vpack.c.b16 %v139, %v137
  %v156 = vpack.c.b16 %v140, %v138
  %173 = vmatpush.bf16.msra.mxu0 %v155
  %174 = vmatpush.bf16.msra.mxu0 %v153
  %175 = vmatpush.bf16.msra.mxu0 %v151
  %176 = vmatpush.bf16.msra.mxu0 %v149
  %177 = vmatpush.bf16.msra.mxu0 %v147
  %178 = vmatpush.bf16.msra.mxu0 %v145
  %179 = vmatpush.bf16.msra.mxu0 %v143
  %180 = vmatpush.bf16.msra.mxu0 %v141
  %181 = vmatmul.bf16.gmra.mxu0 %v77
  %v182 = vpop.f32.mrf.mxu0
  %v183 = vadd.f32 0.0, %v182
  %v184 = vpop.f32.mrf.mxu0
  %v185 = vadd.f32 0.0, %v184
  %186 = vmatmul.bf16.gmra.mxu0 %v78
  %v187 = vpop.f32.mrf.mxu0
  %v188 = vadd.f32 0.0, %v187
  %v189 = vpop.f32.mrf.mxu0
  %v190 = vadd.f32 0.0, %v189
  %191 = vmatmul.bf16.gmra.mxu0 %v79
  %v192 = vpop.f32.mrf.mxu0
  %v193 = vadd.f32 0.0, %v192
  %v194 = vpop.f32.mrf.mxu0
  %v195 = vadd.f32 0.0, %v194
  %196 = vmatmul.bf16.gmra.mxu0 %v80
  %v197 = vpop.f32.mrf.mxu0
  %v198 = vadd.f32 0.0, %v197
  %v199 = vpop.f32.mrf.mxu0
  %v200 = vadd.f32 0.0, %v199
  %201 = vmatmul.bf16.gmra.mxu0 %v81
  %v202 = vpop.f32.mrf.mxu0
  %v203 = vadd.f32 0.0, %v202
  %v204 = vpop.f32.mrf.mxu0
  %v205 = vadd.f32 0.0, %v204
  %206 = vmatmul.bf16.gmra.mxu0 %v82
  %v207 = vpop.f32.mrf.mxu0
  %v208 = vadd.f32 0.0, %v207
  %v209 = vpop.f32.mrf.mxu0
  %v210 = vadd.f32 0.0, %v209
  %211 = vmatmul.bf16.gmra.mxu0 %v83
  %v212 = vpop.f32.mrf.mxu0
  %v213 = vadd.f32 0.0, %v212
  %v214 = vpop.f32.mrf.mxu0
  %v215 = vadd.f32 0.0, %v214
  %216 = vmatmul.bf16.gmra.mxu0 %v84
  %v217 = vpop.f32.mrf.mxu0
  %v218 = vadd.f32 0.0, %v217
  %v219 = vpop.f32.mrf.mxu0
  %v220 = vadd.f32 0.0, %v219
  %221 = vdwg.mxu0
  %222 = vmatpush.bf16.msra.mxu0 %v156
  %223 = vmatpush.bf16.msra.mxu0 %v154
  %224 = vmatpush.bf16.msra.mxu0 %v152
  %225 = vmatpush.bf16.msra.mxu0 %v150
  %226 = vmatpush.bf16.msra.mxu0 %v148
  %227 = vmatpush.bf16.msra.mxu0 %v146
  %228 = vmatpush.bf16.msra.mxu0 %v144
  %229 = vmatpush.bf16.msra.mxu0 %v142
  %230 = vmatmul.bf16.gmra.mxu0 %v77
  %v231 = vpop.f32.mrf.mxu0
  %v232 = vadd.f32 0.0, %v231
  %v233 = vpop.f32.mrf.mxu0
  %v234 = vadd.f32 0.0, %v233
  %235 = vmatmul.bf16.gmra.mxu0 %v78
  %v236 = vpop.f32.mrf.mxu0
  %v237 = vadd.f32 0.0, %v236
  %v238 = vpop.f32.mrf.mxu0
  %v239 = vadd.f32 0.0, %v238
  %240 = vmatmul.bf16.gmra.mxu0 %v79
  %v241 = vpop.f32.mrf.mxu0
  %v242 = vadd.f32 0.0, %v241
  %v243 = vpop.f32.mrf.mxu0
  %v244 = vadd.f32 0.0, %v243
  %245 = vmatmul.bf16.gmra.mxu0 %v80
  %v246 = vpop.f32.mrf.mxu0
  %v247 = vadd.f32 0.0, %v246
  %v248 = vpop.f32.mrf.mxu0
  %v249 = vadd.f32 0.0, %v248
  %250 = vmatmul.bf16.gmra.mxu0 %v81
  %v251 = vpop.f32.mrf.mxu0
  %v252 = vadd.f32 0.0, %v251
  %v253 = vpop.f32.mrf.mxu0
  %v254 = vadd.f32 0.0, %v253
  %255 = vmatmul.bf16.gmra.mxu0 %v82
  %v256 = vpop.f32.mrf.mxu0
  %v257 = vadd.f32 0.0, %v256
  %v258 = vpop.f32.mrf.mxu0
  %v259 = vadd.f32 0.0, %v258
  %260 = vmatmul.bf16.gmra.mxu0 %v83
  %v261 = vpop.f32.mrf.mxu0
  %v262 = vadd.f32 0.0, %v261
  %v263 = vpop.f32.mrf.mxu0
  %v264 = vadd.f32 0.0, %v263
  %265 = vmatmul.bf16.gmra.mxu0 %v84
  %v266 = vpop.f32.mrf.mxu0
  %v267 = vadd.f32 0.0, %v266
  %v268 = vpop.f32.mrf.mxu0
  %v269 = vadd.f32 0.0, %v268
  %270 = vdwg.mxu0
  %271 = vst [vmem:[%s2] sm:$0xff] %v183
  %272 = vst [vmem:[%s2 + $0x8] sm:$0xff] %v232
  %273 = vst [vmem:[%s2 + $0x10] sm:$0xff] %v185
  %274 = vst [vmem:[%s2 + $0x18] sm:$0xff] %v234
  %275 = vst [vmem:[%s2 + $0x20] sm:$0xff] %v188
  %276 = vst [vmem:[%s2 + $0x28] sm:$0xff] %v237
  %277 = vst [vmem:[%s2 + $0x30] sm:$0xff] %v190
  %278 = vst [vmem:[%s2 + $0x38] sm:$0xff] %v239
  %279 = vst [vmem:[%s2 + $0x40] sm:$0xff] %v193
  %280 = vst [vmem:[%s2 + $0x48] sm:$0xff] %v242
  %281 = vst [vmem:[%s2 + $0x50] sm:$0xff] %v195
  %282 = vst [vmem:[%s2 + $0x58] sm:$0xff] %v244
  %283 = vst [vmem:[%s2 + $0x60] sm:$0xff] %v198
  %284 = vst [vmem:[%s2 + $0x68] sm:$0xff] %v247
  %285 = vst [vmem:[%s2 + $0x70] sm:$0xff] %v200
  %286 = vst [vmem:[%s2 + $0x78] sm:$0xff] %v249
  %287 = vst [vmem:[%s2 + $0x80] sm:$0xff] %v203
  %288 = vst [vmem:[%s2 + $0x88] sm:$0xff] %v252
  %289 = vst [vmem:[%s2 + $0x90] sm:$0xff] %v205
  %290 = vst [vmem:[%s2 + $0x98] sm:$0xff] %v254
  %291 = vst [vmem:[%s2 + $0xa0] sm:$0xff] %v208
  %292 = vst [vmem:[%s2 + $0xa8] sm:$0xff] %v257
  %293 = vst [vmem:[%s2 + $0xb0] sm:$0xff] %v210
  %294 = vst [vmem:[%s2 + $0xb8] sm:$0xff] %v259
  %295 = vst [vmem:[%s2 + $0xc0] sm:$0xff] %v213
  %296 = vst [vmem:[%s2 + $0xc8] sm:$0xff] %v262
  %297 = vst [vmem:[%s2 + $0xd0] sm:$0xff] %v215
  %298 = vst [vmem:[%s2 + $0xd8] sm:$0xff] %v264
  %299 = vst [vmem:[%s2 + $0xe0] sm:$0xff] %v218
  %300 = vst [vmem:[%s2 + $0xe8] sm:$0xff] %v267
  %301 = vst [vmem:[%s2 + $0xf0] sm:$0xff] %v220
  %302 = vst [vmem:[%s2 + $0xf8] sm:$0xff] %v269
  %v303 = vadd.f32 %v183, %v185
  %v304 = vadd.f32 %v303, %v188
  %v305 = vadd.f32 %v304, %v190
  %v306 = vadd.f32 %v305, %v193
  %v307 = vadd.f32 %v306, %v195
  %v308 = vadd.f32 %v307, %v198
  %v309 = vadd.f32 %v308, %v200
  %v310 = vadd.f32 %v309, %v203
  %v311 = vadd.f32 %v310, %v205
  %v312 = vadd.f32 %v311, %v208
  %v313 = vadd.f32 %v312, %v210
  %v314 = vadd.f32 %v313, %v213
  %v315 = vadd.f32 %v314, %v215
  %v316 = vadd.f32 %v315, %v218
  %v317 = vadd.f32 %v316, %v220
  %v318 = vrot.slane %v317, 4
  %v319 = vadd.f32 %v317, %v318
  %v320 = vrot.slane %v319, 2
  %v321 = vadd.f32 %v319, %v320
  %v322 = vrot.slane %v321, 1
  %v323 = vadd.f32 %v321, %v322
  %v324 = vadd.f32 %v232, %v234
  %v325 = vadd.f32 %v324, %v237
  %v326 = vadd.f32 %v325, %v239
  %v327 = vadd.f32 %v326, %v242
  %v328 = vadd.f32 %v327, %v244
  %v329 = vadd.f32 %v328, %v247
  %v330 = vadd.f32 %v329, %v249
  %v331 = vadd.f32 %v330, %v252
  %v332 = vadd.f32 %v331, %v254
  %v333 = vadd.f32 %v332, %v257
  %v334 = vadd.f32 %v333, %v259
  %v335 = vadd.f32 %v334, %v262
  %v336 = vadd.f32 %v335, %v264
  %v337 = vadd.f32 %v336, %v267
  %v338 = vadd.f32 %v337, %v269
  %v339 = vrot.slane %v338, 4
  %v340 = vadd.f32 %v338, %v339
  %v341 = vrot.slane %v340, 2
  %v342 = vadd.f32 %v340, %v341
  %v343 = vrot.slane %v342, 1
  %v344 = vadd.f32 %v342, %v343
  %v345 = vmul.f32 %v183, %v183
  %v346 = vmul.f32 %v232, %v232
  %v347 = vmul.f32 %v185, %v185
  %v348 = vmul.f32 %v234, %v234
  %v349 = vmul.f32 %v188, %v188
  %v350 = vmul.f32 %v237, %v237
  %v351 = vmul.f32 %v190, %v190
  %v352 = vmul.f32 %v239, %v239
  %v353 = vmul.f32 %v193, %v193
  %v354 = vmul.f32 %v242, %v242
  %v355 = vmul.f32 %v195, %v195
  %v356 = vmul.f32 %v244, %v244
  %v357 = vmul.f32 %v198, %v198
  %v358 = vmul.f32 %v247, %v247
  %v359 = vmul.f32 %v200, %v200
  %v360 = vmul.f32 %v249, %v249
  %v361 = vmul.f32 %v203, %v203
  %v362 = vmul.f32 %v252, %v252
  %v363 = vmul.f32 %v205, %v205
  %v364 = vmul.f32 %v254, %v254
  %v365 = vmul.f32 %v208, %v208
  %v366 = vmul.f32 %v257, %v257
  %v367 = vmul.f32 %v210, %v210
  %v368 = vmul.f32 %v259, %v259
  %v369 = vmul.f32 %v213, %v213
  %v370 = vmul.f32 %v262, %v262
  %v371 = vmul.f32 %v215, %v215
  %v372 = vmul.f32 %v264, %v264
  %v373 = vmul.f32 %v218, %v218
  %v374 = vmul.f32 %v267, %v267
  %v375 = vmul.f32 %v220, %v220
  %v376 = vmul.f32 %v269, %v269
  %v377 = vadd.f32 %v345, %v347
  %v378 = vadd.f32 %v377, %v349
  %v379 = vadd.f32 %v378, %v351
  %v380 = vadd.f32 %v379, %v353
  %v381 = vadd.f32 %v380, %v355
  %v382 = vadd.f32 %v381, %v357
  %v383 = vadd.f32 %v382, %v359
  %v384 = vadd.f32 %v383, %v361
  %v385 = vadd.f32 %v384, %v363
  %v386 = vadd.f32 %v385, %v365
  %v387 = vadd.f32 %v386, %v367
  %v388 = vadd.f32 %v387, %v369
  %v389 = vadd.f32 %v388, %v371
  %v390 = vadd.f32 %v389, %v373
  %v391 = vadd.f32 %v390, %v375
  %v392 = vrot.slane %v391, 4
  %v393 = vadd.f32 %v391, %v392
  %v394 = vrot.slane %v393, 2
  %v395 = vadd.f32 %v393, %v394
  %v396 = vrot.slane %v395, 1
  %v397 = vadd.f32 %v395, %v396
  %v398 = vadd.f32 %v346, %v348
  %v399 = vadd.f32 %v398, %v350
  %v400 = vadd.f32 %v399, %v352
  %v401 = vadd.f32 %v400, %v354
  %v402 = vadd.f32 %v401, %v356
  %v403 = vadd.f32 %v402, %v358
  %v404 = vadd.f32 %v403, %v360
  %v405 = vadd.f32 %v404, %v362
  %v406 = vadd.f32 %v405, %v364
  %v407 = vadd.f32 %v406, %v366
  %v408 = vadd.f32 %v407, %v368
  %v409 = vadd.f32 %v408, %v370
  %v410 = vadd.f32 %v409, %v372
  %v411 = vadd.f32 %v410, %v374
  %v412 = vadd.f32 %v411, %v376
  %v413 = vrot.slane %v412, 4
  %v414 = vadd.f32 %v412, %v413
  %v415 = vrot.slane %v414, 2
  %v416 = vadd.f32 %v414, %v415
  %v417 = vrot.slane %v416, 1
  %v418 = vadd.f32 %v416, %v417
  %vm419 = vcmask 1040384
  %v420 = vsel %vm419, %v323, %v397
  %v421 = vsel %vm419, %v344, %v418
  %vm422 = vcmask 1041408
  %v423 = vsel %vm422, %v420, 0.0
  %v424 = vsel %vm422, %v421, 0.0
  %425 = vst [vmem:[%s3] sm:$0xff] %v423
  %426 = vst [vmem:[%s3 + $0x8] sm:$0xff] %v424
  // Predicated region
  $region10: #{_forward_impl.2} parent=0 // pred_check
    _
  $region11: #{_forward_impl.2} parent=0 // pred_check_branch
    %428 = sbr.rel (0) target = $region13
  $region12: #{_forward_impl.2} parent=0 // pred_region
    _
  $region13: #{_forward_impl.2} parent=0 // pred_fallthru
    _
  // Predicated region
  $region14: #{_forward_impl.2} parent=0 // pred_check
    _
  $region15: #{_forward_impl.2} parent=0 // pred_check_branch
    %430 = sbr.rel (0) target = $region17
  $region16: #{_forward_impl.2} parent=0 // pred_region
    _
  $region17: #{_forward_impl.2} parent=0 // pred_fallthru
    _
  // Predicated region
  $region18: #{_forward_impl.2} parent=0 // pred_check
    _
  $region19: #{_forward_impl.2} parent=0 // pred_check_branch
    %432 = sbr.rel (0) target = $region21
  $region20: #{_forward_impl.2} parent=0 // pred_region
    _
  $region21: #{_forward_impl.2} parent=0 // pred_fallthru
    _
  // Predicated region
  $region22: #{_forward_impl.2} parent=0 // pred_check
    _
  $region23: #{_forward_impl.2} parent=0 // pred_check_branch
    %434 = sbr.rel (0) target = $region25
  $region24: #{_forward_impl.2} parent=0 // pred_region
    _
  $region25: #{_forward_impl.2} parent=0 // pred_fallthru
    _

</llo_original>
